<compile_context>
chip_gen: v6e
topology: v6e:2x2x1
jax: 0.10.0
libtpu: 0.0.40
codegen_flags: <defaults>
</compile_context>

<pallas_src>
import functools

import jax
import jax.numpy as jnp
from jax.experimental import pallas as pl
from jax.experimental.pallas import tpu as pltpu


def _gelu_tanh(x):
    # tanh-approximate GELU: 0.5*x*(1+tanh(sqrt(2/pi)*(x+0.044715*x^3)))
    c = 0.7978845608028654  # sqrt(2/pi)
    return 0.5 * x * (1.0 + jnp.tanh(c * (x + 0.044715 * x * x * x)))


def _linreg_head_kernel(x_ref, w_ref, b_ref, o_ref):
    # x_ref: (TM, H)  w_ref: (H, O)  b_ref: (1, O)  o_ref: (TM, O)
    # Feed native-dtype tiles straight to the MXU; accumulate in f32.
    h = jnp.dot(x_ref[...], w_ref[...], preferred_element_type=jnp.float32)
    h = h + b_ref[...].astype(jnp.float32)
    o_ref[...] = _gelu_tanh(h).astype(o_ref.dtype)


def _choose_tile_m(M, H, O, itemsize, requested):
    """Pick an M-tile: as large as requested, MXU-aligned, within VMEM budget."""
    if M <= requested:
        # Whole token axis fits in a single block (block dim == full array dim).
        return int(M)
    # Conservative budget so the double-buffered X tile + resident W/bias +
    # double-buffered out tile + f32 temporaries fit even on v7x (64 MiB VMEM).
    budget = 40 * 1024 * 1024
    resident = H * O * itemsize + 4 * O + 4096
    per_row = 2 * H * itemsize + 2 * O * itemsize + 4 * O  # x dbuf + out dbuf + f32 acc
    cap = max(8, (budget - resident) // per_row)
    tm = min(requested, cap)
    if tm >= 256:
        tm = (tm // 256) * 256          # match 256x256 MXU tiles (v6e/v7x)
    else:
        tm = max(8, (tm // 8) * 8)      # sublane alignment floor
    return int(tm)


@functools.partial(jax.jit, static_argnames=("tile_m",))
def linreg_head(embedding, attention_mask, weight, bias, *, tile_m=512):
    """embedding: [B, S, H], attention_mask: [B, S] (unused in eval path),
    weight: [O, H] (PyTorch nn.Linear layout), bias: [O].
    Returns scores: [B, S, O]."""
    del attention_mask  # eval-mode variational dropout == identity
    B, S, H = embedding.shape
    O = weight.shape[0]

    x = embedding.reshape(B * S, H)
    M = B * S
    itemsize = jnp.dtype(embedding.dtype).itemsize

    tm = _choose_tile_m(M, H, O, itemsize, tile_m)

    w_t = weight.T                      # [H, O]
    b2d = bias.reshape(1, O)            # 2-D for TPU layout

    # NOTE: if O << 128 and a profile shows store-slot pressure, pad W/bias to
    # 128 output lanes and slice the result (lane-dense vst); skipped here since
    # writeback traffic is tiny relative to X reads.

    grid = (pl.cdiv(M, tm),)
    cost = pl.CostEstimate(
        flops=2 * M * H * O,
        transcendentals=M * O,
        bytes_accessed=(M * H + H * O + M * O) * itemsize + 4 * O,
    )

    out = pl.pallas_call(
        _linreg_head_kernel,
        out_shape=jax.ShapeDtypeStruct((M, O), embedding.dtype),
        grid_spec=pltpu.PrefetchScalarGridSpec(
            num_scalar_prefetch=0,
            grid=grid,
            in_specs=[
                pl.BlockSpec((tm, H), lambda i: (i, 0)),
                pl.BlockSpec((H, O), lambda i: (0, 0)),
                pl.BlockSpec((1, O), lambda i: (0, 0)),
            ],
            out_specs=pl.BlockSpec((tm, O), lambda i: (i, 0)),
        ),
        compiler_params=pltpu.CompilerParams(
            dimension_semantics=("parallel",),
            vmem_limit_bytes=48 * 1024 * 1024,
        ),
        cost_estimate=cost,
    )(x, w_t, b2d)

    return out.reshape(B, S, O)


def _reference(embedding, weight, bias):
    h = jnp.einsum("bsh,oh->bso", embedding.astype(jnp.float32),
                   weight.astype(jnp.float32)) + bias.astype(jnp.float32)
    return _gelu_tanh(h).astype(embedding.dtype)


if __name__ == "__main__":
    key = jax.random.PRNGKey(0)
    B, S, H, O = 2, 8, 32, 8  # batch, seq, hidden_size, output_size

    k_emb, k_w, k_b, k_mask = jax.random.split(key, 4)
    embedding = jax.random.normal(k_emb, (B, S, H), dtype=jnp.float32)
    attention_mask = (jax.random.uniform(k_mask, (B, S)) > 0.2).astype(jnp.float32)

    # Deterministic nn.Linear-style init: W ~ U(-1/sqrt(H), 1/sqrt(H)), same for b.
    bound = 1.0 / (H ** 0.5)
    weight = jax.random.uniform(k_w, (O, H), minval=-bound, maxval=bound,
                                dtype=jnp.float32)
    bias = jax.random.uniform(k_b, (O,), minval=-bound, maxval=bound,
                              dtype=jnp.float32)

    scores = linreg_head(embedding, attention_mask, weight, bias)
    scores = jax.block_until_ready(scores)

    ref = _reference(embedding, weight, bias)
    assert scores.shape == (B, S, O)
    assert jnp.allclose(scores, ref, atol=1e-5, rtol=1e-5)

    print("KERNEL_OK")
</pallas_src>

<mosaic_0001>
module attributes {stable_mosaic.version = 11 : i64} {
  func.func @_linreg_head_kernel(%arg0: i32, %arg1: memref<16x32xf32, #tpu.memory_space<vmem>>, %arg2: memref<32x8xf32, #tpu.memory_space<vmem>>, %arg3: memref<1x8xf32, #tpu.memory_space<vmem>>, %arg4: memref<16x8xf32, #tpu.memory_space<vmem>>) attributes {dimension_semantics = [#tpu.dimension_semantics<parallel>], iteration_bounds = array<i64: 1>, scalar_prefetch = 0 : i64, scratch_operands = 0 : i64, tpu.core_type = #tpu.core_type<tc>, window_params = [{transform_indices = @transform_0, window_bounds = array<i64: 16, 32>}, {pipeline_mode = #tpu.pipeline_mode<synchronous>, transform_indices = @transform_1, window_bounds = array<i64: 32, 8>}, {pipeline_mode = #tpu.pipeline_mode<synchronous>, transform_indices = @transform_2, window_bounds = array<i64: 1, 8>}, {transform_indices = @transform_3, window_bounds = array<i64: 16, 8>}]} {
    %c0 = arith.constant 0 : index
    %c0_0 = arith.constant 0 : index
    %0 = vector.load %arg1[%c0, %c0_0] : memref<16x32xf32, #tpu.memory_space<vmem>>, vector<16x32xf32>
    %c0_1 = arith.constant 0 : index
    %c0_2 = arith.constant 0 : index
    %1 = vector.load %arg2[%c0_1, %c0_2] : memref<32x8xf32, #tpu.memory_space<vmem>>, vector<32x8xf32>
    %cst = arith.constant dense<0.000000e+00> : vector<16x8xf32>
    %2 = tpu.matmul %0, %1, %cst {dimension_numbers = #tpu.dot_dimension_numbers<[1], [0], [0], [1], [0, 0, 1, 1], [], []>} : vector<16x32xf32>, vector<32x8xf32>, vector<16x8xf32> -> vector<16x8xf32>
    %c0_3 = arith.constant 0 : index
    %c0_4 = arith.constant 0 : index
    %3 = vector.load %arg3[%c0_3, %c0_4] : memref<1x8xf32, #tpu.memory_space<vmem>>, vector<1x8xf32>
    %4 = vector.broadcast %3 : vector<1x8xf32> to vector<16x8xf32>
    %5 = arith.addf %2, %4 : vector<16x8xf32>
    %cst_5 = arith.constant 5.000000e-01 : f32
    %6 = vector.broadcast %cst_5 : f32 to vector<16x8xf32>
    %7 = arith.mulf %6, %5 : vector<16x8xf32>
    %cst_6 = arith.constant 4.471500e-02 : f32
    %8 = vector.broadcast %cst_6 : f32 to vector<16x8xf32>
    %9 = arith.mulf %8, %5 : vector<16x8xf32>
    %10 = arith.mulf %9, %5 : vector<16x8xf32>
    %11 = arith.mulf %10, %5 : vector<16x8xf32>
    %12 = arith.addf %5, %11 : vector<16x8xf32>
    %cst_7 = arith.constant 0.797884583 : f32
    %13 = vector.broadcast %cst_7 : f32 to vector<16x8xf32>
    %14 = arith.mulf %13, %12 : vector<16x8xf32>
    %15 = math.tanh %14 : vector<16x8xf32>
    %cst_8 = arith.constant 1.000000e+00 : f32
    %16 = vector.broadcast %cst_8 : f32 to vector<16x8xf32>
    %17 = arith.addf %16, %15 : vector<16x8xf32>
    %18 = arith.mulf %7, %17 : vector<16x8xf32>
    %c0_9 = arith.constant 0 : index
    %c0_10 = arith.constant 0 : index
    %19 = vector.load %arg4[%c0_9, %c0_10] : memref<16x8xf32, #tpu.memory_space<vmem>>, vector<16x8xf32>
    tpu.vector_store %arg4[%c0_9, %c0_10], %18 {strides = array<i32>} : memref<16x8xf32, #tpu.memory_space<vmem>>, vector<16x8xf32>,
    return
  }
  func.func @transform_0(%arg0: i32) -> (i32, i32) {
    %c0_i32 = arith.constant 0 : i32
    %c0_i32_0 = arith.constant 0 : i32
    return %arg0, %c0_i32 : i32, i32
  }
  func.func @transform_1(%arg0: i32) -> (i32, i32) {
    %c0_i32 = arith.constant 0 : i32
    %c0_i32_0 = arith.constant 0 : i32
    %c0_i32_1 = arith.constant 0 : i32
    return %c0_i32, %c0_i32_0 : i32, i32
  }
  func.func @transform_2(%arg0: i32) -> (i32, i32) {
    %c0_i32 = arith.constant 0 : i32
    %c0_i32_0 = arith.constant 0 : i32
    %c0_i32_1 = arith.constant 0 : i32
    return %c0_i32, %c0_i32_0 : i32, i32
  }
  func.func @transform_3(%arg0: i32) -> (i32, i32) {
    %c0_i32 = arith.constant 0 : i32
    %c0_i32_0 = arith.constant 0 : i32
    return %arg0, %c0_i32 : i32, i32
  }
}

</mosaic_0001>

<llo_original>
// kernel: linreg_head.1
$region0: #{linreg_head.1}
  #allocation0 [shape = 'u32[]', space=smem, size = 0x4, offset = 0x4, fixed_abs, tag = 'smem constant byte address 0x4 - core index']
  #allocation1 [shape = 'u32[144,128]{1,0:T(1,128)}', space=vmem, size = 0x12000, scoped, tag = 'internal scratch']
  %s0 = inlined_call_operand.vmem [shape: f32[16,32], index: 0, kind: input, shape index: {}]
  %s1 = inlined_call_operand.vmem [shape: f32[32,8], index: 1, kind: input, shape index: {}]
  %s2 = inlined_call_operand.vmem [shape: f32[1,8], index: 2, kind: input, shape index: {}]
  %s3 = inlined_call_operand.hbm [shape: f32[16,8], index: 3, kind: output, shape index: {}]
  %s4 = sld [smem:[#allocation0]]
  $region22: #{linreg_head.1} parent=0
    _
  %s6 = ssub.s32 1, %s4
  %s7 = scalar_select 0, %s6, %s4
  $region1: #{linreg_head.1} parent=0
    #allocation2 [shape = 'u8[8192]{0}', space=vmem, size = 0x2000, scoped, tag = 'output window, operand 0, single buffered']
    #allocation3 [shape = 's32[1]{0}', space=sflag, size = 0x4, scoped, tag = 'scoped memory for linreg_head.1']
    %8 = vsyncpa [#allocation3], 0
    // Predicated region
    $region2: #{linreg_head.1} parent=1 // pred_check
      _
    $region3: #{linreg_head.1} parent=1 // pred_check_branch
      %10 = sbr.rel (0) target = $region5
    $region4: #{linreg_head.1} parent=1 // pred_region
      _
    $region5: #{linreg_head.1} parent=1 // pred_fallthru
      _
    // Predicated region
    $region6: #{linreg_head.1} parent=1 // pred_check
      _
    $region7: #{linreg_head.1} parent=1 // pred_check_branch
      %12 = sbr.rel (0) target = $region9
    $region8: #{linreg_head.1} parent=1 // pred_region
      _
    $region9: #{linreg_head.1} parent=1 // pred_fallthru
      _
    // Predicated region
    $region10: #{linreg_head.1} parent=1 // pred_check
      _
    $region11: #{linreg_head.1} parent=1 // pred_check_branch
      %14 = sbr.rel (0) target = $region13
    $region12: #{linreg_head.1} parent=1 // pred_region
      _
    $region13: #{linreg_head.1} parent=1 // pred_fallthru
      _
    %v15 = vld [vmem:[%s0] sm:$0xff]
    %v16 = vld [vmem:[%s0 + $0x8] sm:$0xff]
    %v17 = vld [vmem:[%s1] sm:$0xff]
    %v18 = vld [vmem:[%s1 + $0x8] sm:$0xff]
    %v19 = vld [vmem:[%s1 + $0x10] sm:$0xff]
    %v20 = vld [vmem:[%s1 + $0x18] sm:$0xff]
    %v21 = vld [vmem:[%s2] sm:$0x1]
    %v23 = vlaneseq
    %v24 = vshrl.u32 %v23, 7
    %v25 = vsub.s32 0, %v24
    %v26 = vrot.slane %v21, %v25
    %vm28 = vcmask 261120
    %v30 = vsel %vm28, %v15, 0
    %v33 = vsel %vm28, %v16, 0
    %35 = vmatprep.subr.mxu0 0.0
    %36 = vmatpush1.msra.mxu0 0.0
    %37 = vmatprep.subr.mxu0 0.0
    %38 = vmatpush1.msra.mxu0 0.0
    %39 = vmatprep.subr.mxu0 0.0
    %40 = vmatpush1.msra.mxu0 0.0
    %41 = vmatprep.subr.mxu0 0.0
    %42 = vmatpush1.msra.mxu0 0.0
    %43 = vmatprep.subr.mxu0 0.0
    %44 = vmatpush1.msra.mxu0 0.0
    %45 = vmatprep.subr.mxu0 0.0
    %46 = vmatpush1.msra.mxu0 0.0
    %47 = vmatprep.subr.mxu0 0.0
    %48 = vmatpush1.msra.mxu0 0.0
    %49 = vmatprep.subr.mxu0 0.0
    %50 = vmatpush1.msra.mxu0 0.0
    %51 = vmatprep.subr.mxu0 0.0
    %52 = vmatpush1.msra.mxu0 0.0
    %53 = vmatprep.subr.mxu0 0.0
    %54 = vmatpush1.msra.mxu0 0.0
    %55 = vmatprep.subr.mxu0 0.0
    %56 = vmatpush1.msra.mxu0 0.0
    %57 = vmatprep.subr.mxu0 0.0
    %58 = vmatpush1.msra.mxu0 0.0
    %59 = vmatprep.subr.mxu0 0.0
    %60 = vmatpush1.msra.mxu0 %v20
    %61 = vmatprep.subr.mxu0 0.0
    %62 = vmatpush1.msra.mxu0 %v19
    %63 = vmatprep.subr.mxu0 0.0
    %64 = vmatpush1.msra.mxu0 %v18
    %65 = vmatprep.subr.mxu0 0.0
    %66 = vmatpush1.msra.mxu0 %v17
    %67 = vmatprep.subr.mxu0 0.0
    %68 = vmatpush2.msra.mxu0 0.0
    %69 = vmatprep.subr.mxu0 0.0
    %70 = vmatpush2.msra.mxu0 0.0
    %71 = vmatprep.subr.mxu0 0.0
    %72 = vmatpush2.msra.mxu0 0.0
    %73 = vmatprep.subr.mxu0 0.0
    %74 = vmatpush2.msra.mxu0 0.0
    %75 = vmatprep.subr.mxu0 0.0
    %76 = vmatpush2.msra.mxu0 0.0
    %77 = vmatprep.subr.mxu0 0.0
    %78 = vmatpush2.msra.mxu0 0.0
    %79 = vmatprep.subr.mxu0 0.0
    %80 = vmatpush2.msra.mxu0 0.0
    %81 = vmatprep.subr.mxu0 0.0
    %82 = vmatpush2.msra.mxu0 0.0
    %83 = vmatprep.subr.mxu0 0.0
    %84 = vmatpush2.msra.mxu0 0.0
    %85 = vmatprep.subr.mxu0 0.0
    %86 = vmatpush2.msra.mxu0 0.0
    %87 = vmatprep.subr.mxu0 0.0
    %88 = vmatpush2.msra.mxu0 0.0
    %89 = vmatprep.subr.mxu0 0.0
    %90 = vmatpush2.msra.mxu0 0.0
    %91 = vmatprep.subr.mxu0 0.0
    %92 = vmatpush2.msra.mxu0 0.0
    %93 = vmatprep.subr.mxu0 0.0
    %94 = vmatpush2.msra.mxu0 0.0
    %95 = vmatprep.subr.mxu0 0.0
    %96 = vmatpush2.msra.mxu0 0.0
    %97 = vmatprep.subr.mxu0 0.0
    %98 = vmatpush2.msra.mxu0 0.0
    %99 = vmatprep.mubr.f32.mxu0 0.0
    %100 = vmatmul.mubr.f32.gmra.mxu0 %v30
    %v101 = vpop.f32.mrf.mxu0
    %v102 = vadd.f32 %v26, %v101
    %v103 = vpop.f32.mrf.mxu0
    %104 = vmatprep.mubr.f32.mxu0 0.0
    %105 = vmatmul.mubr.f32.gmra.mxu0 %v33
    %v106 = vpop.f32.mrf.mxu0
    %v107 = vadd.f32 %v26, %v106
    %v108 = vpop.f32.mrf.mxu0
    %109 = vdwg.mxu0
    %v110 = vmul.f32 %v102, 0.5
    %v111 = vmul.f32 %v107, 0.5
    %v112 = vmul.f32 %v102, 0.044715
    %v113 = vmul.f32 %v107, 0.044715
    %v114 = vmul.f32 %v112, %v102
    %v115 = vmul.f32 %v113, %v107
    %v116 = vmul.f32 %v114, %v102
    %v117 = vmul.f32 %v115, %v107
    %v118 = vadd.f32 %v102, %v116
    %v119 = vadd.f32 %v107, %v117
    %v120 = vmul.f32 %v118, 0.7978846
    %v121 = vmul.f32 %v119, 0.7978846
    %v122 = vtanh.pop %v120
    %v123 = vtanh.pop %v121
    %v124 = vadd.f32 %v122, 1.0
    %v125 = vadd.f32 %v123, 1.0
    %v126 = vmul.f32 %v110, %v124
    %v127 = vmul.f32 %v111, %v125
    %vm128 = vcmask 64512
    %129 = vst.msk [vmem:[#allocation2] sm:$0xff] %vm128, %v126
    %130 = vst.msk [vmem:[#allocation2 + $0x8] sm:$0xff] %vm128, %v127
    // Predicated region
    $region14: #{linreg_head.1} parent=1 // pred_check
      _
    $region15: #{linreg_head.1} parent=1 // pred_check_branch
      %132 = sbr.rel (0) target = $region17
    $region16: #{linreg_head.1} parent=1 // pred_region
      %s134 = ssub.s32 256, 256
      %135 = vsyncadd [#allocation3], %s134
      %s136 = sshll.u32 [#allocation2], 4
      %s137 = int_to_ptr.vmem [resolvable:$true] %s136
      %142 = dma.vmem_to_hbm [thread:$0]  %s137, 256, %s3, [#allocation3], 128, 128, 8
    $region17: #{linreg_head.1} parent=1 // pred_fallthru
      _
    // Predicated region
    $region18: #{linreg_head.1} parent=1 // pred_check
      _
    $region19: #{linreg_head.1} parent=1 // pred_check_branch
      %144 = sbr.rel (0) target = $region21
    $region20: #{linreg_head.1} parent=1 // pred_region
      %145 = dma.done [#allocation3], 256
    $region21: #{linreg_head.1} parent=1 // pred_fallthru
      _
    %146 = vsyncpa [#allocation3], 1

</llo_original>
